<compile_context>
chip_gen: v7x
topology: tpu7x:2x2x1
jax: 0.10.0
libtpu: 0.0.40
codegen_flags: <defaults>
</compile_context>

<pallas_src>
import jax
import jax.numpy as jnp
from jax import lax
from jax.experimental import pallas as pl
from jax.experimental.pallas import tpu as pltpu


def _softplus(x):
    # PyTorch F.softplus (beta=1, threshold=20): x if x > 20 else log1p(exp(x)).
    safe = jnp.minimum(x, 20.0)
    return jnp.where(x > 20.0, x, jnp.log1p(jnp.exp(safe)))


def make_positive_kernel(x_ref, o_ref):
    x = x_ref[...]                                            # (tile_r, lanes)
    # Hoisted (1, lanes) parity mask; jnp.where broadcasts it over the row tile.
    # Even flat index (== even lane, since lanes is even) -> mu, odd -> sigma.
    lane = lax.broadcasted_iota(jnp.int32, (1, x.shape[-1]), 1)
    is_mu = (lane & 1) == 0
    # softplus also runs on mu lanes and is discarded by the select; hidden under
    # the HBM roofline on v5e/v6e.
    # TODO(synk): if the EUP slot ever binds on v7x, deinterleave mu/sigma
    # upstream so softplus only touches the sigma half.
    o_ref[...] = jnp.where(is_mu, x, _softplus(x)).astype(o_ref.dtype)


def _round_up(a, m):
    return ((a + m - 1) // m) * m


def _chip_defaults():
    """(max_block_bytes, tensorcores_per_chip) tuned per TPU generation."""
    max_block_bytes, num_tc = 2 << 20, 1          # v5e / v6e: 2 MiB ~ roofline
    try:
        kind = (getattr(jax.devices()[0], "device_kind", "") or "").lower()
        if "v7" in kind or "7x" in kind:          # v7x: bigger blocks, 2 TCs
            max_block_bytes, num_tc = 8 << 20, 2
    except Exception:
        pass
    return max_block_bytes, num_tc


def make_positive(x, *, lanes=512, max_block_bytes=None):
    """x: (N, 2) array; returns (N, 2) with softplus applied to column 1."""
    n, c = x.shape
    assert c == 2, "MakePositive expects exactly 2 channels (mu, sigma)"
    dtype = x.dtype
    itemsize = jnp.dtype(dtype).itemsize

    default_block, num_tc = _chip_defaults()
    if max_block_bytes is None:
        max_block_bytes = default_block

    flat_len = n * c

    # Pick the widest lane-dense width that divides 2*N so no pad is needed;
    # fall back to `lanes` + a tiny tail pad only for truly awkward N.
    chosen = None
    for cand in (lanes, 256, 128):
        if cand % 128 == 0 and flat_len % cand == 0:
            chosen = cand
            break
    if chosen is None:
        chosen = lanes
    lanes = chosen
    assert lanes % 128 == 0 and lanes % 2 == 0, "lanes must be an even multiple of 128"

    rows = -(-flat_len // lanes)
    tail_pad = rows * lanes - flat_len            # < lanes; 0 for aligned N

    flat = x.reshape(flat_len)
    if tail_pad:
        # Sub-lane tail only; guarantee N % (lanes//2) == 0 upstream to avoid it.
        flat = jnp.pad(flat, (0, tail_pad))
    slab = flat.reshape(rows, lanes)

    # dtype-native sublane multiple: 8 (f32), 16 (bf16), 32 (int8/fp8).
    sub = max(8, 32 // itemsize)
    tile_r_cap = max(sub, (max_block_bytes // (lanes * itemsize)) // sub * sub)
    tile_r = _round_up(rows, sub) if rows <= tile_r_cap else tile_r_cap
    if num_tc >= 2 and rows > sub:
        # Keep both v7x TensorCores busy: force >= 2 grid steps.
        tile_r = min(tile_r, _round_up(-(-rows // 2), sub))

    grid = (-(-rows // tile_r),)                  # Pallas masks the ragged tail block

    block_bytes = tile_r * lanes * itemsize
    # 2x-in + 2x-out double buffers + headroom; well under v7x's 64 MiB VMEM.
    vmem_limit = int(min(4 * block_bytes + (8 << 20), 48 << 20))

    out_slab = pl.pallas_call(
        make_positive_kernel,
        out_shape=jax.ShapeDtypeStruct((rows, lanes), dtype),
        grid=grid,
        in_specs=[pl.BlockSpec((tile_r, lanes), lambda i: (i, 0))],
        out_specs=pl.BlockSpec((tile_r, lanes), lambda i: (i, 0)),
        compiler_params=pltpu.CompilerParams(
            dimension_semantics=("parallel",),
            vmem_limit_bytes=vmem_limit,
        ),
    )(slab)

    out_flat = out_slab.reshape(rows * lanes)
    if tail_pad:
        out_flat = out_flat[:flat_len]
    return out_flat.reshape(n, c)


def make_positive_ref(x):
    """Pure-JAX reference matching the PyTorch forward."""
    mu = x[:, 0:1]
    sigma = _softplus(x[:, 1:2])
    return jnp.concatenate([mu, sigma], axis=1)


if __name__ == "__main__":
    key = jax.random.PRNGKey(0)

    # Small shapes consistent with the module (N nodes, 2 channels):
    #  N=256  -> aligned, zero pad, single block
    #  N=768  -> aligned lanes, ragged final row-block (no pad, no slice)
    #  N=1000 -> awkward N, exercises the tiny tail-pad fallback
    for N in (256, 768, 1000):
        k = jax.random.fold_in(key, N)
        x = jax.random.normal(k, (N, 2), dtype=jnp.float32) * 5.0

        out = jax.block_until_ready(make_positive(x))
        ref = make_positive_ref(x)

        assert out.shape == (N, 2)
        assert out.dtype == x.dtype
        assert jnp.allclose(out, ref, atol=1e-6, rtol=1e-6), f"mismatch at N={N}"

    print("KERNEL_OK")
</pallas_src>

<mosaic_0001>
module attributes {stable_mosaic.version = 11 : i64} {
  func.func @make_positive_kernel(%arg0: i32, %arg1: memref<8x512xf32, #tpu.memory_space<vmem>>, %arg2: memref<8x512xf32, #tpu.memory_space<vmem>>) attributes {dimension_semantics = [#tpu.dimension_semantics<parallel>], iteration_bounds = array<i64: 1>, scalar_prefetch = 0 : i64, scratch_operands = 0 : i64, tpu.core_type = #tpu.core_type<tc>, window_params = [{transform_indices = @transform_0, window_bounds = array<i64: 8, 512>}, {transform_indices = @transform_1, window_bounds = array<i64: 8, 512>}]} {
    %c0 = arith.constant 0 : index
    %c0_0 = arith.constant 0 : index
    %0 = vector.load %arg1[%c0, %c0_0] : memref<8x512xf32, #tpu.memory_space<vmem>>, vector<8x512xf32>
    %1 = tpu.iota {dimensions = array<i32: 1>} : vector<1x512xi32>
    %c1_i32 = arith.constant 1 : i32
    %2 = vector.broadcast %c1_i32 : i32 to vector<1x512xi32>
    %3 = arith.andi %1, %2 : vector<1x512xi32>
    %c0_i32 = arith.constant 0 : i32
    %4 = vector.broadcast %c0_i32 : i32 to vector<1x512xi32>
    %5 = arith.cmpi eq, %3, %4 : vector<1x512xi32>
    %cst = arith.constant 2.000000e+01 : f32
    %6 = vector.broadcast %cst : f32 to vector<8x512xf32>
    %7 = arith.minimumf %0, %6 : vector<8x512xf32>
    %cst_1 = arith.constant 2.000000e+01 : f32
    %8 = vector.broadcast %cst_1 : f32 to vector<8x512xf32>
    %9 = arith.cmpf ogt, %0, %8 : vector<8x512xf32>
    %10 = math.exp %7 : vector<8x512xf32>
    %11 = math.log1p %10 : vector<8x512xf32>
    %12 = arith.select %9, %0, %11 : vector<8x512xi1>, vector<8x512xf32>
    %13 = vector.shape_cast %5 : vector<1x512xi1> to vector<1x512xi1>
    %14 = vector.broadcast %13 : vector<1x512xi1> to vector<8x512xi1>
    %15 = arith.select %14, %0, %12 : vector<8x512xi1>, vector<8x512xf32>
    %c0_2 = arith.constant 0 : index
    %c0_3 = arith.constant 0 : index
    %16 = vector.load %arg2[%c0_2, %c0_3] : memref<8x512xf32, #tpu.memory_space<vmem>>, vector<8x512xf32>
    tpu.vector_store %arg2[%c0_2, %c0_3], %15 {strides = array<i32>} : memref<8x512xf32, #tpu.memory_space<vmem>>, vector<8x512xf32>,
    return
  }
  func.func @transform_0(%arg0: i32) -> (i32, i32) {
    %c0_i32 = arith.constant 0 : i32
    %c0_i32_0 = arith.constant 0 : i32
    return %arg0, %c0_i32 : i32, i32
  }
  func.func @transform_1(%arg0: i32) -> (i32, i32) {
    %c0_i32 = arith.constant 0 : i32
    %c0_i32_0 = arith.constant 0 : i32
    return %arg0, %c0_i32 : i32, i32
  }
}

</mosaic_0001>

<llo_original>
// kernel: tpu_custom_call.1
$region0: #{tpu_custom_call.1}
  #allocation0 [shape = 'u32[]', space=smem, size = 0x4, offset = 0x4, fixed_abs, tag = 'smem constant byte address 0x4 - core index']
  #allocation1 [shape = 'u32[144,128]{1,0:T(1,128)}', space=vmem, size = 0x12000, scoped, tag = 'internal scratch']
  %s0 = inlined_call_operand.hbm [shape: f32[1,512], index: 0, kind: input, shape index: {}]
  %s1 = inlined_call_operand.hbm [shape: f32[1,512], index: 1, kind: output, shape index: {}]
  %s2 = sld [smem:[#allocation0]]
  $region18: #{tpu_custom_call.1} parent=0
    _
  %s4 = ssub.s32 1, %s2
  %s5 = scalar_select 0, %s4, %s2
  $region1: #{tpu_custom_call.1} parent=0
    #allocation2 [shape = 'u8[16384]{0}', space=vmem, size = 0x4000, scoped, tag = 'input window, operand 0, single buffered']
    #allocation3 [shape = 's32[1]{0}', space=sflag, size = 0x4, scoped, tag = 'scoped memory for tpu_custom_call.1']
    #allocation4 [shape = 's32[1]{0}', space=sflag, size = 0x4, scoped, tag = 'scoped memory for tpu_custom_call.1']
    #allocation5 [shape = 'u8[16384]{0}', space=vmem, size = 0x4000, scoped, tag = 'output window, operand 0, single buffered']
    %6 = vsyncpa [#allocation3], 0
    %7 = vsyncpa [#allocation4], 0
    // Predicated region
    $region2: #{tpu_custom_call.1} parent=1 // pred_check
      _
    $region3: #{tpu_custom_call.1} parent=1 // pred_check_branch
      %9 = sbr.rel (0) target = $region5
    $region4: #{tpu_custom_call.1} parent=1 // pred_region
      %s11 = ssub.s32 512, 64
      %12 = vsyncadd [#allocation3], %s11
      %s13 = sshll.u32 [#allocation2], 4
      %s14 = int_to_ptr.vmem [resolvable:$true] %s13
      %19 = dma.hbm_to_vmem [thread:$0]  %s0, 64, %s14, [#allocation3], 64, 64, 4
    $region5: #{tpu_custom_call.1} parent=1 // pred_fallthru
      _
    // Predicated region
    $region6: #{tpu_custom_call.1} parent=1 // pred_check
      _
    $region7: #{tpu_custom_call.1} parent=1 // pred_check_branch
      %21 = sbr.rel (0) target = $region9
    $region8: #{tpu_custom_call.1} parent=1 // pred_region
      %22 = dma.done [#allocation3], 512
    $region9: #{tpu_custom_call.1} parent=1 // pred_fallthru
      _
    %v23 = vld [vmem:[#allocation2] sm:$0xf]
    %v24 = vld [vmem:[#allocation2 + $0x4] sm:$0xf]
    %v25 = vld [vmem:[#allocation2 + $0x8] sm:$0xf]
    %v26 = vld [vmem:[#allocation2 + $0xc] sm:$0xf]
    %v27 = vld [vmem:[#allocation2 + $0x10] sm:$0xf]
    %v28 = vld [vmem:[#allocation2 + $0x14] sm:$0xf]
    %v29 = vld [vmem:[#allocation2 + $0x18] sm:$0xf]
    %v30 = vld [vmem:[#allocation2 + $0x1c] sm:$0xf]
    %v31 = vlaneseq
    %v32 = vand.u32 %v31, 127
    %v33 = vadd.s32 %v32, 128
    %v34 = vadd.s32 %v32, 256
    %v35 = vadd.s32 %v32, 384
    %v36 = vand.u32 %v32, 1
    %v37 = vand.u32 %v33, 1
    %v38 = vand.u32 %v34, 1
    %v39 = vand.u32 %v35, 1
    %vm40 = vcmp.eq.s32.totalorder %v36, 0
    %vm41 = vcmp.eq.s32.totalorder %v37, 0
    %vm42 = vcmp.eq.s32.totalorder %v38, 0
    %vm43 = vcmp.eq.s32.totalorder %v39, 0
    %v44 = vmin.f32 %v23, 20.0
    %v45 = vmin.f32 %v24, 20.0
    %v46 = vmin.f32 %v25, 20.0
    %v47 = vmin.f32 %v26, 20.0
    %v48 = vmin.f32 %v27, 20.0
    %v49 = vmin.f32 %v28, 20.0
    %v50 = vmin.f32 %v29, 20.0
    %v51 = vmin.f32 %v30, 20.0
    %vm52 = vcmp.gt.f32.partialorder %v23, 20.0
    %vm53 = vcmp.gt.f32.partialorder %v24, 20.0
    %vm54 = vcmp.gt.f32.partialorder %v25, 20.0
    %vm55 = vcmp.gt.f32.partialorder %v26, 20.0
    %vm56 = vcmp.gt.f32.partialorder %v27, 20.0
    %vm57 = vcmp.gt.f32.partialorder %v28, 20.0
    %vm58 = vcmp.gt.f32.partialorder %v29, 20.0
    %vm59 = vcmp.gt.f32.partialorder %v30, 20.0
    %v60 = vmul.f32 %v44, 1.442695
    %v61 = vpow.pop %v60
    %v62 = vmul.f32 %v45, 1.442695
    %v63 = vpow.pop %v62
    %v64 = vmul.f32 %v46, 1.442695
    %v65 = vpow.pop %v64
    %v66 = vmul.f32 %v47, 1.442695
    %v67 = vpow.pop %v66
    %v68 = vmul.f32 %v48, 1.442695
    %v69 = vpow.pop %v68
    %v70 = vmul.f32 %v49, 1.442695
    %v71 = vpow.pop %v70
    %v72 = vmul.f32 %v50, 1.442695
    %v73 = vpow.pop %v72
    %v74 = vmul.f32 %v51, 1.442695
    %v75 = vpow.pop %v74
    %v76 = vadd.f32 %v61, 1.0
    %v77 = vlog2.pop %v76
    %v78 = vmul.f32 %v77, 0.6931472
    %v79 = vmul.f32 -0.5, %v61
    %v80 = vadd.f32 %v79, 1.0
    %v81 = vmul.f32 %v80, %v61
    %v82 = vand.u32 2147483647, %v61
    %vm83 = vcmp.lt.f32.partialorder %v82, 0.0004427343
    %v84 = vsel %vm83, %v81, %v78
    %v85 = vadd.f32 %v63, 1.0
    %v86 = vlog2.pop %v85
    %v87 = vmul.f32 %v86, 0.6931472
    %v88 = vmul.f32 -0.5, %v63
    %v89 = vadd.f32 %v88, 1.0
    %v90 = vmul.f32 %v89, %v63
    %v91 = vand.u32 2147483647, %v63
    %vm92 = vcmp.lt.f32.partialorder %v91, 0.0004427343
    %v93 = vsel %vm92, %v90, %v87
    %v94 = vadd.f32 %v65, 1.0
    %v95 = vlog2.pop %v94
    %v96 = vmul.f32 %v95, 0.6931472
    %v97 = vmul.f32 -0.5, %v65
    %v98 = vadd.f32 %v97, 1.0
    %v99 = vmul.f32 %v98, %v65
    %v100 = vand.u32 2147483647, %v65
    %vm101 = vcmp.lt.f32.partialorder %v100, 0.0004427343
    %v102 = vsel %vm101, %v99, %v96
    %v103 = vadd.f32 %v67, 1.0
    %v104 = vlog2.pop %v103
    %v105 = vmul.f32 %v104, 0.6931472
    %v106 = vmul.f32 -0.5, %v67
    %v107 = vadd.f32 %v106, 1.0
    %v108 = vmul.f32 %v107, %v67
    %v109 = vand.u32 2147483647, %v67
    %vm110 = vcmp.lt.f32.partialorder %v109, 0.0004427343
    %v111 = vsel %vm110, %v108, %v105
    %v112 = vadd.f32 %v69, 1.0
    %v113 = vlog2.pop %v112
    %v114 = vmul.f32 %v113, 0.6931472
    %v115 = vmul.f32 -0.5, %v69
    %v116 = vadd.f32 %v115, 1.0
    %v117 = vmul.f32 %v116, %v69
    %v118 = vand.u32 2147483647, %v69
    %vm119 = vcmp.lt.f32.partialorder %v118, 0.0004427343
    %v120 = vsel %vm119, %v117, %v114
    %v121 = vadd.f32 %v71, 1.0
    %v122 = vlog2.pop %v121
    %v123 = vmul.f32 %v122, 0.6931472
    %v124 = vmul.f32 -0.5, %v71
    %v125 = vadd.f32 %v124, 1.0
    %v126 = vmul.f32 %v125, %v71
    %v127 = vand.u32 2147483647, %v71
    %vm128 = vcmp.lt.f32.partialorder %v127, 0.0004427343
    %v129 = vsel %vm128, %v126, %v123
    %v130 = vadd.f32 %v73, 1.0
    %v131 = vlog2.pop %v130
    %v132 = vmul.f32 %v131, 0.6931472
    %v133 = vmul.f32 -0.5, %v73
    %v134 = vadd.f32 %v133, 1.0
    %v135 = vmul.f32 %v134, %v73
    %v136 = vand.u32 2147483647, %v73
    %vm137 = vcmp.lt.f32.partialorder %v136, 0.0004427343
    %v138 = vsel %vm137, %v135, %v132
    %v139 = vadd.f32 %v75, 1.0
    %v140 = vlog2.pop %v139
    %v141 = vmul.f32 %v140, 0.6931472
    %v142 = vmul.f32 -0.5, %v75
    %v143 = vadd.f32 %v142, 1.0
    %v144 = vmul.f32 %v143, %v75
    %v145 = vand.u32 2147483647, %v75
    %vm146 = vcmp.lt.f32.partialorder %v145, 0.0004427343
    %v147 = vsel %vm146, %v144, %v141
    %v148 = vsel %vm52, %v23, %v84
    %v149 = vsel %vm53, %v24, %v93
    %v150 = vsel %vm54, %v25, %v102
    %v151 = vsel %vm55, %v26, %v111
    %v152 = vsel %vm56, %v27, %v120
    %v153 = vsel %vm57, %v28, %v129
    %v154 = vsel %vm58, %v29, %v138
    %v155 = vsel %vm59, %v30, %v147
    %v156 = vsel %vm40, 1, 0
    %v157 = vsel %vm41, 1, 0
    %v158 = vsel %vm42, 1, 0
    %v159 = vsel %vm43, 1, 0
    %vm160 = vcmp.eq.s32.totalorder %v156, 1
    %vm161 = vcmp.eq.s32.totalorder %v157, 1
    %vm162 = vcmp.eq.s32.totalorder %v158, 1
    %vm163 = vcmp.eq.s32.totalorder %v159, 1
    %v172 = vcombine.low %v23, %v24
    %v173 = vcombine.low %v25, %v26
    %v174 = vcombine.low %v27, %v28
    %v175 = vcombine.low %v29, %v30
    %v177 = vunpack.c.l.s4 1966171168
    %v178 = vunpack.c.0.s8 %v177
    %v179 = vlaneseq
    %v180 = vshrl.u32 %v179, 7
    %v181 = vsub.s32 %v178, %v180
    %v182 = vrot.slane %v172, %v181
    %v184 = vunpack.c.l.s4 1966171168
    %v185 = vunpack.c.0.s8 %v184
    %v186 = vlaneseq
    %v187 = vshrl.u32 %v186, 7
    %v188 = vsub.s32 %v185, %v187
    %v189 = vrot.slane %v173, %v188
    %v191 = vunpack.c.l.s4 1966171168
    %v192 = vunpack.c.0.s8 %v191
    %v193 = vlaneseq
    %v194 = vshrl.u32 %v193, 7
    %v195 = vsub.s32 %v192, %v194
    %v196 = vrot.slane %v174, %v195
    %v198 = vunpack.c.l.s4 1966171168
    %v199 = vunpack.c.0.s8 %v198
    %v200 = vlaneseq
    %v201 = vshrl.u32 %v200, 7
    %v202 = vsub.s32 %v199, %v201
    %v203 = vrot.slane %v175, %v202
    %v204 = vcombine.low %v182, %v189
    %v205 = vcombine.high %v182, %v189
    %v206 = vcombine.low %v196, %v203
    %v207 = vcombine.high %v196, %v203
    %v209 = vunpack.c.l.s4 1966171168
    %v210 = vunpack.c.0.s8 %v209
    %v211 = vlaneseq
    %v212 = vshrl.u32 %v211, 7
    %v213 = vsub.s32 %v210, %v212
    %v214 = vrot.slane %v204, %v213
    %v216 = vunpack.c.l.s4 1966171168
    %v217 = vunpack.c.0.s8 %v216
    %v218 = vlaneseq
    %v219 = vshrl.u32 %v218, 7
    %v220 = vsub.s32 %v217, %v219
    %v221 = vrot.slane %v205, %v220
    %v223 = vunpack.c.l.s4 1966171168
    %v224 = vunpack.c.0.s8 %v223
    %v225 = vlaneseq
    %v226 = vshrl.u32 %v225, 7
    %v227 = vsub.s32 %v224, %v226
    %v228 = vrot.slane %v206, %v227
    %v230 = vunpack.c.l.s4 1966171168
    %v231 = vunpack.c.0.s8 %v230
    %v232 = vlaneseq
    %v233 = vshrl.u32 %v232, 7
    %v234 = vsub.s32 %v231, %v233
    %v235 = vrot.slane %v207, %v234
    %v236 = vcombine.low %v214, %v228
    %v237 = vcombine.high %v214, %v228
    %v238 = vcombine.low %v221, %v235
    %v239 = vcombine.high %v221, %v235
    %v252 = vcombine.low %v148, %v149
    %v253 = vcombine.low %v150, %v151
    %v254 = vcombine.low %v152, %v153
    %v255 = vcombine.low %v154, %v155
    %v257 = vunpack.c.l.s4 1966171168
    %v258 = vunpack.c.0.s8 %v257
    %v259 = vlaneseq
    %v260 = vshrl.u32 %v259, 7
    %v261 = vsub.s32 %v258, %v260
    %v262 = vrot.slane %v252, %v261
    %v264 = vunpack.c.l.s4 1966171168
    %v265 = vunpack.c.0.s8 %v264
    %v266 = vlaneseq
    %v267 = vshrl.u32 %v266, 7
    %v268 = vsub.s32 %v265, %v267
    %v269 = vrot.slane %v253, %v268
    %v271 = vunpack.c.l.s4 1966171168
    %v272 = vunpack.c.0.s8 %v271
    %v273 = vlaneseq
    %v274 = vshrl.u32 %v273, 7
    %v275 = vsub.s32 %v272, %v274
    %v276 = vrot.slane %v254, %v275
    %v278 = vunpack.c.l.s4 1966171168
    %v279 = vunpack.c.0.s8 %v278
    %v280 = vlaneseq
    %v281 = vshrl.u32 %v280, 7
    %v282 = vsub.s32 %v279, %v281
    %v283 = vrot.slane %v255, %v282
    %v284 = vcombine.low %v262, %v269
    %v285 = vcombine.high %v262, %v269
    %v286 = vcombine.low %v276, %v283
    %v287 = vcombine.high %v276, %v283
    %v289 = vunpack.c.l.s4 1966171168
    %v290 = vunpack.c.0.s8 %v289
    %v291 = vlaneseq
    %v292 = vshrl.u32 %v291, 7
    %v293 = vsub.s32 %v290, %v292
    %v294 = vrot.slane %v284, %v293
    %v296 = vunpack.c.l.s4 1966171168
    %v297 = vunpack.c.0.s8 %v296
    %v298 = vlaneseq
    %v299 = vshrl.u32 %v298, 7
    %v300 = vsub.s32 %v297, %v299
    %v301 = vrot.slane %v285, %v300
    %v303 = vunpack.c.l.s4 1966171168
    %v304 = vunpack.c.0.s8 %v303
    %v305 = vlaneseq
    %v306 = vshrl.u32 %v305, 7
    %v307 = vsub.s32 %v304, %v306
    %v308 = vrot.slane %v286, %v307
    %v310 = vunpack.c.l.s4 1966171168
    %v311 = vunpack.c.0.s8 %v310
    %v312 = vlaneseq
    %v313 = vshrl.u32 %v312, 7
    %v314 = vsub.s32 %v311, %v313
    %v315 = vrot.slane %v287, %v314
    %v316 = vcombine.low %v294, %v308
    %v317 = vcombine.high %v294, %v308
    %v318 = vcombine.low %v301, %v315
    %v319 = vcombine.high %v301, %v315
    %v324 = vsel %vm160, %v236, %v316
    %v325 = vsel %vm161, %v238, %v318
    %v326 = vsel %vm162, %v237, %v317
    %v327 = vsel %vm163, %v239, %v319
    %v332 = vcombine.low %v324, %v325
    %v333 = vcombine.high %v324, %v325
    %v334 = vcombine.low %v326, %v327
    %v335 = vcombine.high %v326, %v327
    %v337 = vunpack.c.l.s4 1966171168
    %v338 = vunpack.c.0.s8 %v337
    %v339 = vlaneseq
    %v340 = vshrl.u32 %v339, 7
    %v341 = vsub.s32 %v338, %v340
    %v342 = vrot.slane %v332, %v341
    %v344 = vunpack.c.l.s4 1966171168
    %v345 = vunpack.c.0.s8 %v344
    %v346 = vlaneseq
    %v347 = vshrl.u32 %v346, 7
    %v348 = vsub.s32 %v345, %v347
    %v349 = vrot.slane %v333, %v348
    %v351 = vunpack.c.l.s4 1966171168
    %v352 = vunpack.c.0.s8 %v351
    %v353 = vlaneseq
    %v354 = vshrl.u32 %v353, 7
    %v355 = vsub.s32 %v352, %v354
    %v356 = vrot.slane %v334, %v355
    %v358 = vunpack.c.l.s4 1966171168
    %v359 = vunpack.c.0.s8 %v358
    %v360 = vlaneseq
    %v361 = vshrl.u32 %v360, 7
    %v362 = vsub.s32 %v359, %v361
    %v363 = vrot.slane %v335, %v362
    %v364 = vcombine.low %v342, %v356
    %v365 = vcombine.high %v342, %v356
    %v366 = vcombine.low %v349, %v363
    %v367 = vcombine.high %v349, %v363
    %v369 = vunpack.c.l.s4 1966171168
    %v370 = vunpack.c.0.s8 %v369
    %v371 = vlaneseq
    %v372 = vshrl.u32 %v371, 7
    %v373 = vsub.s32 %v370, %v372
    %v374 = vrot.slane %v364, %v373
    %v376 = vunpack.c.l.s4 1966171168
    %v377 = vunpack.c.0.s8 %v376
    %v378 = vlaneseq
    %v379 = vshrl.u32 %v378, 7
    %v380 = vsub.s32 %v377, %v379
    %v381 = vrot.slane %v366, %v380
    %v383 = vunpack.c.l.s4 1966171168
    %v384 = vunpack.c.0.s8 %v383
    %v385 = vlaneseq
    %v386 = vshrl.u32 %v385, 7
    %v387 = vsub.s32 %v384, %v386
    %v388 = vrot.slane %v365, %v387
    %v390 = vunpack.c.l.s4 1966171168
    %v391 = vunpack.c.0.s8 %v390
    %v392 = vlaneseq
    %v393 = vshrl.u32 %v392, 7
    %v394 = vsub.s32 %v391, %v393
    %v395 = vrot.slane %v367, %v394
    %v396 = vcombine.high %v374, %v374
    %v397 = vcombine.high %v381, %v381
    %v398 = vcombine.high %v388, %v388
    %v399 = vcombine.high %v395, %v395
    %v408 = vlaneseq
    %vm409 = vcmp.ge.s32.totalorder %v408, 0
    %vm410 = vcmp.lt.s32.totalorder %v408, 512
    %vm411 = vmand %vm409, %vm410
    %412 = vst.msk [vmem:[#allocation5] sm:$0xf] %vm411, %v374
    %413 = vst.msk [vmem:[#allocation5 + $0x4] sm:$0xf] %vm411, %v388
    %414 = vst.msk [vmem:[#allocation5 + $0x8] sm:$0xf] %vm411, %v396
    %415 = vst.msk [vmem:[#allocation5 + $0xc] sm:$0xf] %vm411, %v398
    %416 = vst.msk [vmem:[#allocation5 + $0x10] sm:$0xf] %vm411, %v381
    %417 = vst.msk [vmem:[#allocation5 + $0x14] sm:$0xf] %vm411, %v395
    %418 = vst.msk [vmem:[#allocation5 + $0x18] sm:$0xf] %vm411, %v397
    %419 = vst.msk [vmem:[#allocation5 + $0x1c] sm:$0xf] %vm411, %v399
    // Predicated region
    $region10: #{tpu_custom_call.1} parent=1 // pred_check
      _
    $region11: #{tpu_custom_call.1} parent=1 // pred_check_branch
      %421 = sbr.rel (0) target = $region13
    $region12: #{tpu_custom_call.1} parent=1 // pred_region
      %s423 = ssub.s32 512, 64
      %424 = vsyncadd [#allocation4], %s423
      %s425 = sshll.u32 [#allocation5], 4
      %s426 = int_to_ptr.vmem [resolvable:$true] %s425
      %431 = dma.vmem_to_hbm [thread:$0]  %s426, 64, %s1, [#allocation4], 64, 64, 4
    $region13: #{tpu_custom_call.1} parent=1 // pred_fallthru
      _
    // Predicated region
    $region14: #{tpu_custom_call.1} parent=1 // pred_check
      _
    $region15: #{tpu_custom_call.1} parent=1 // pred_check_branch
      %433 = sbr.rel (0) target = $region17
    $region16: #{tpu_custom_call.1} parent=1 // pred_region
      %434 = dma.done [#allocation4], 512
    $region17: #{tpu_custom_call.1} parent=1 // pred_fallthru
      _
    %435 = vsyncpa [#allocation3], 1
    %436 = vsyncpa [#allocation4], 1

</llo_original>
